<compile_context>
chip_gen: v7x
topology: tpu7x:2x2x1
jax: 0.10.0
libtpu: 0.0.40
codegen_flags: <defaults>
</compile_context>

<pallas_src>
import functools

import jax
import jax.numpy as jnp
from jax import lax
from jax.experimental import pallas as pl
from jax.experimental.pallas import tpu as pltpu


# -----------------------------------------------------------------------------
# Kernel
# -----------------------------------------------------------------------------
def make_mlp_kernel(n_linear: int):
    """Build a Pallas kernel for the (host-fused) MLP, feature-major inside.

    Ref order: (x_ref, [W_i, b_i] * n_linear, out_ref)
      x_ref  : (tile, D_in)         batch-major input tile
      W_i    : (out_i, in_i)        feature-major weights
      b_i    : (out_i, 1)           column biases (broadcast over lanes)
      out_ref: (D_out, tile)        feature-major output tile (lane-dense)
    tanh is applied after every layer except the last; the exp(-o) sign is
    already folded into the last layer's weights/bias on the host.
    """

    def kernel(*refs):
        x_ref = refs[0]
        out_ref = refs[-1]

        h = None
        for li in range(n_linear):
            w = refs[1 + 2 * li][...]
            b = refs[2 + 2 * li][...]
            if li == 0:
                # (out, in) contracted with (tile, in) over the feature axis
                # -> (out, tile).  The big x tile is consumed batch-major; no
                # explicit transpose of x is materialized.
                h = lax.dot_general(
                    w, x_ref[...],
                    dimension_numbers=(((1,), (1,)), ((), ())),
                    preferred_element_type=jnp.float32,
                ) + b
            else:
                h = jnp.dot(w, h, preferred_element_type=jnp.float32) + b
            if li < n_linear - 1:
                h = jnp.tanh(h)          # lane-dense (features, tile)

        out_ref[...] = jnp.exp(h)        # sign already folded; dense store

    return kernel


# -----------------------------------------------------------------------------
# Host-side parameter handling
# -----------------------------------------------------------------------------
def init_params(key, input_size, layers, output_size):
    """Deterministic init (uniform, Kaiming-ish bound like nn.Linear).

    Returns the *unfused*, math-convention params:
      [W_in (in, l0), b_in (1, l0), W_h..., b_h..., W_out, b_out].
    """
    dims = [input_size] + list(layers) + [output_size]
    params = []
    for i in range(len(dims) - 1):
        key, kw, kb = jax.random.split(key, 3)
        bound = 1.0 / (dims[i] ** 0.5)
        W = jax.random.uniform(kw, (dims[i], dims[i + 1]), jnp.float32, -bound, bound)
        b = jax.random.uniform(kb, (1, dims[i + 1]), jnp.float32, -bound, bound)
        params += [W, b]
    return params


def prepare_kernel_params(params):
    """Fold the activation-free input layer into the next linear, fold the
    exp(-o) negation into the output layer, and convert every linear to the
    feature-major layout the kernel expects: W (out, in), b (out, 1)."""
    W_in, b_in = params[0], params[1]
    W1, b1 = params[2], params[3]
    mats = [W_in @ W1] + [params[i] for i in range(4, len(params), 2)]
    vecs = [b_in @ W1 + b1] + [params[i] for i in range(5, len(params), 2)]
    # fold exp(-o) -> exp(o) by negating the output layer
    mats[-1] = -mats[-1]
    vecs[-1] = -vecs[-1]
    out = []
    for W, b in zip(mats, vecs):
        out.append(jnp.asarray(W.T, jnp.float32))               # (out, in)
        out.append(jnp.asarray(b, jnp.float32).reshape(-1, 1))  # (out, 1)
    return out


def _round_up(x, m):
    return ((x + m - 1) // m) * m


# -----------------------------------------------------------------------------
# pallas_call wrapper
# -----------------------------------------------------------------------------
@functools.partial(jax.jit, static_argnames=("batch_tile", "transposed_output"))
def rho_fcnet_forward(x, kernel_params, batch_tile=4096, transposed_output=False):
    """Run the fused MLP in one Pallas kernel, tiled over the batch.

    x: (B, D_in) float32.  Returns (B, D_out) by default, or (D_out, B) if
    transposed_output=True (skips the final host transpose pass).
    """
    B, D_in = x.shape
    n_linear = len(kernel_params) // 2
    D_out = kernel_params[-1].shape[0]

    # Batch tile carries the lane axis of every activation / the output store,
    # so it must be a multiple of 128.  It may exceed B: Pallas masks the
    # partial block (no host padding, no output slice).
    tile = min(int(batch_tile), _round_up(B, 128))
    tile = max(128, _round_up(tile, 128))
    grid = pl.cdiv(B, tile)

    in_specs = [pl.BlockSpec((tile, D_in), lambda i: (i, 0))]
    for p in kernel_params:
        # grid-invariant full-array blocks (weights stay resident in VMEM)
        in_specs.append(pl.BlockSpec(p.shape, lambda i: (0, 0)))
    out_spec = pl.BlockSpec((D_out, tile), lambda i: (0, i))

    out_t = pl.pallas_call(
        make_mlp_kernel(n_linear),
        out_shape=jax.ShapeDtypeStruct((D_out, B), jnp.float32),
        grid=(grid,),
        in_specs=in_specs,
        out_specs=out_spec,
        compiler_params=pltpu.CompilerParams(
            dimension_semantics=("parallel",)   # megacore sharding on v7x
        ),
    )(x, *kernel_params)

    return out_t if transposed_output else out_t.T


# -----------------------------------------------------------------------------
# Pure-JAX reference (uses the ORIGINAL, unfused params)
# -----------------------------------------------------------------------------
def rho_fcnet_reference(x, params):
    n_linear = len(params) // 2
    h = x @ params[0] + params[1]                      # layer_in, no activation
    for li in range(1, n_linear - 1):
        h = jnp.tanh(h @ params[2 * li] + params[2 * li + 1])
    o = h @ params[2 * (n_linear - 1)] + params[2 * (n_linear - 1) + 1]
    return jnp.exp(-o)


if __name__ == "__main__":
    # Module-consistent small shapes: input_size=16, layers=[32, 32], output=8.
    input_size = 16
    layers = [32, 32]        # -> one hidden nn.Linear(32, 32) with tanh
    output_size = 8

    key = jax.random.PRNGKey(0)
    params = init_params(key, input_size, layers, output_size)
    kparams = prepare_kernel_params(params)

    # Case 1: ragged batch (50), single grid step with a masked partial block.
    key, kx1 = jax.random.split(key)
    x1 = jax.random.normal(kx1, (50, input_size), dtype=jnp.float32)
    out1 = jax.block_until_ready(rho_fcnet_forward(x1, kparams))
    ref1 = rho_fcnet_reference(x1, params)
    assert out1.shape == (50, output_size)
    assert jnp.allclose(out1, ref1, atol=1e-5, rtol=1e-4), "case1 mismatch"

    # Case 2: multi-step grid with a partial last block (300 = 2*128 + 44).
    key, kx2 = jax.random.split(key)
    x2 = jax.random.normal(kx2, (300, input_size), dtype=jnp.float32)
    out2 = jax.block_until_ready(rho_fcnet_forward(x2, kparams, batch_tile=128))
    ref2 = rho_fcnet_reference(x2, params)
    assert out2.shape == (300, output_size)
    assert jnp.allclose(out2, ref2, atol=1e-5, rtol=1e-4), "case2 mismatch"

    print("KERNEL_OK")
</pallas_src>

<mosaic_0001>
module attributes {stable_mosaic.version = 11 : i64} {
  func.func @kernel(%arg0: i32, %arg1: memref<128x16xf32, #tpu.memory_space<vmem>>, %arg2: memref<32x16xf32, #tpu.memory_space<vmem>>, %arg3: memref<32x1xf32, #tpu.memory_space<vmem>>, %arg4: memref<8x32xf32, #tpu.memory_space<vmem>>, %arg5: memref<8x1xf32, #tpu.memory_space<vmem>>, %arg6: memref<8x128xf32, #tpu.memory_space<vmem>>) attributes {dimension_semantics = [#tpu.dimension_semantics<parallel>], iteration_bounds = array<i64: 1>, scalar_prefetch = 0 : i64, scratch_operands = 0 : i64, tpu.core_type = #tpu.core_type<tc>, window_params = [{transform_indices = @transform_0, window_bounds = array<i64: 128, 16>}, {pipeline_mode = #tpu.pipeline_mode<synchronous>, transform_indices = @transform_1, window_bounds = array<i64: 32, 16>}, {pipeline_mode = #tpu.pipeline_mode<synchronous>, transform_indices = @transform_2, window_bounds = array<i64: 32, 1>}, {pipeline_mode = #tpu.pipeline_mode<synchronous>, transform_indices = @transform_3, window_bounds = array<i64: 8, 32>}, {pipeline_mode = #tpu.pipeline_mode<synchronous>, transform_indices = @transform_4, window_bounds = array<i64: 8, 1>}, {transform_indices = @transform_5, window_bounds = array<i64: 8, 128>}]} {
    %c0 = arith.constant 0 : index
    %c0_0 = arith.constant 0 : index
    %0 = vector.load %arg2[%c0, %c0_0] : memref<32x16xf32, #tpu.memory_space<vmem>>, vector<32x16xf32>
    %c0_1 = arith.constant 0 : index
    %c0_2 = arith.constant 0 : index
    %1 = vector.load %arg3[%c0_1, %c0_2] : memref<32x1xf32, #tpu.memory_space<vmem>>, vector<32x1xf32>
    %c0_3 = arith.constant 0 : index
    %c0_4 = arith.constant 0 : index
    %2 = vector.load %arg1[%c0_3, %c0_4] : memref<128x16xf32, #tpu.memory_space<vmem>>, vector<128x16xf32>
    %cst = arith.constant dense<0.000000e+00> : vector<32x128xf32>
    %3 = tpu.matmul %0, %2, %cst {dimension_numbers = #tpu.dot_dimension_numbers<[1], [1], [0], [0], [0, 0, 1, 0], [], []>} : vector<32x16xf32>, vector<128x16xf32>, vector<32x128xf32> -> vector<32x128xf32>
    %4 = vector.broadcast %1 : vector<32x1xf32> to vector<32x128xf32>
    %5 = arith.addf %3, %4 : vector<32x128xf32>
    %6 = math.tanh %5 : vector<32x128xf32>
    %c0_5 = arith.constant 0 : index
    %c0_6 = arith.constant 0 : index
    %7 = vector.load %arg4[%c0_5, %c0_6] : memref<8x32xf32, #tpu.memory_space<vmem>>, vector<8x32xf32>
    %c0_7 = arith.constant 0 : index
    %c0_8 = arith.constant 0 : index
    %8 = vector.load %arg5[%c0_7, %c0_8] : memref<8x1xf32, #tpu.memory_space<vmem>>, vector<8x1xf32>
    %cst_9 = arith.constant dense<0.000000e+00> : vector<8x128xf32>
    %9 = tpu.matmul %7, %6, %cst_9 {dimension_numbers = #tpu.dot_dimension_numbers<[1], [0], [0], [1], [0, 0, 1, 1], [], []>} : vector<8x32xf32>, vector<32x128xf32>, vector<8x128xf32> -> vector<8x128xf32>
    %10 = vector.broadcast %8 : vector<8x1xf32> to vector<8x128xf32>
    %11 = arith.addf %9, %10 : vector<8x128xf32>
    %12 = math.exp %11 : vector<8x128xf32>
    %c0_10 = arith.constant 0 : index
    %c0_11 = arith.constant 0 : index
    %13 = vector.load %arg6[%c0_10, %c0_11] : memref<8x128xf32, #tpu.memory_space<vmem>>, vector<8x128xf32>
    tpu.vector_store %arg6[%c0_10, %c0_11], %12 {strides = array<i32>} : memref<8x128xf32, #tpu.memory_space<vmem>>, vector<8x128xf32>,
    return
  }
  func.func @transform_0(%arg0: i32) -> (i32, i32) {
    %c0_i32 = arith.constant 0 : i32
    %c0_i32_0 = arith.constant 0 : i32
    return %arg0, %c0_i32 : i32, i32
  }
  func.func @transform_1(%arg0: i32) -> (i32, i32) {
    %c0_i32 = arith.constant 0 : i32
    %c0_i32_0 = arith.constant 0 : i32
    %c0_i32_1 = arith.constant 0 : i32
    return %c0_i32, %c0_i32_0 : i32, i32
  }
  func.func @transform_2(%arg0: i32) -> (i32, i32) {
    %c0_i32 = arith.constant 0 : i32
    %c0_i32_0 = arith.constant 0 : i32
    %c0_i32_1 = arith.constant 0 : i32
    return %c0_i32, %c0_i32_0 : i32, i32
  }
  func.func @transform_3(%arg0: i32) -> (i32, i32) {
    %c0_i32 = arith.constant 0 : i32
    %c0_i32_0 = arith.constant 0 : i32
    %c0_i32_1 = arith.constant 0 : i32
    return %c0_i32, %c0_i32_0 : i32, i32
  }
  func.func @transform_4(%arg0: i32) -> (i32, i32) {
    %c0_i32 = arith.constant 0 : i32
    %c0_i32_0 = arith.constant 0 : i32
    %c0_i32_1 = arith.constant 0 : i32
    return %c0_i32, %c0_i32_0 : i32, i32
  }
  func.func @transform_5(%arg0: i32) -> (i32, i32) {
    %c0_i32 = arith.constant 0 : i32
    %c0_i32_0 = arith.constant 0 : i32
    return %c0_i32, %arg0 : i32, i32
  }
}

</mosaic_0001>

<llo_original>
// kernel: rho_fcnet_forward.1
$region0: #{rho_fcnet_forward.1}
  #allocation0 [shape = 'u32[]', space=smem, size = 0x4, offset = 0x4, fixed_abs, tag = 'smem constant byte address 0x4 - core index']
  #allocation1 [shape = 'u32[144,128]{1,0:T(1,128)}', space=vmem, size = 0x12000, scoped, tag = 'internal scratch']
  %s0 = inlined_call_operand.vmem [shape: f32[50,16], index: 0, kind: input, shape index: {}]
  %s1 = inlined_call_operand.vmem [shape: f32[32,16], index: 1, kind: input, shape index: {}]
  %s2 = inlined_call_operand.vmem [shape: f32[32,1], index: 2, kind: input, shape index: {}]
  %s3 = inlined_call_operand.vmem [shape: f32[8,32], index: 3, kind: input, shape index: {}]
  %s4 = inlined_call_operand.vmem [shape: f32[8,1], index: 4, kind: input, shape index: {}]
  %s5 = inlined_call_operand.hbm [shape: f32[8,50], index: 5, kind: output, shape index: {}]
  %s6 = sld [smem:[#allocation0]]
  $region30: #{rho_fcnet_forward.1} parent=0
    _
  %s8 = ssub.s32 1, %s6
  %s9 = scalar_select 0, %s8, %s6
  $region1: #{rho_fcnet_forward.1} parent=0
    #allocation2 [shape = 'u8[4096]{0}', space=vmem, size = 0x1000, scoped, tag = 'output window, operand 0, single buffered']
    #allocation3 [shape = 's32[1]{0}', space=sflag, size = 0x4, scoped, tag = 'scoped memory for rho_fcnet_forward.1']
    %10 = vsyncpa [#allocation3], 0
    // Predicated region
    $region2: #{rho_fcnet_forward.1} parent=1 // pred_check
      _
    $region3: #{rho_fcnet_forward.1} parent=1 // pred_check_branch
      %12 = sbr.rel (0) target = $region5
    $region4: #{rho_fcnet_forward.1} parent=1 // pred_region
      _
    $region5: #{rho_fcnet_forward.1} parent=1 // pred_fallthru
      _
    // Predicated region
    $region6: #{rho_fcnet_forward.1} parent=1 // pred_check
      _
    $region7: #{rho_fcnet_forward.1} parent=1 // pred_check_branch
      %14 = sbr.rel (0) target = $region9
    $region8: #{rho_fcnet_forward.1} parent=1 // pred_region
      _
    $region9: #{rho_fcnet_forward.1} parent=1 // pred_fallthru
      _
    // Predicated region
    $region10: #{rho_fcnet_forward.1} parent=1 // pred_check
      _
    $region11: #{rho_fcnet_forward.1} parent=1 // pred_check_branch
      %16 = sbr.rel (0) target = $region13
    $region12: #{rho_fcnet_forward.1} parent=1 // pred_region
      _
    $region13: #{rho_fcnet_forward.1} parent=1 // pred_fallthru
      _
    // Predicated region
    $region14: #{rho_fcnet_forward.1} parent=1 // pred_check
      _
    $region15: #{rho_fcnet_forward.1} parent=1 // pred_check_branch
      %18 = sbr.rel (0) target = $region17
    $region16: #{rho_fcnet_forward.1} parent=1 // pred_region
      _
    $region17: #{rho_fcnet_forward.1} parent=1 // pred_fallthru
      _
    // Predicated region
    $region18: #{rho_fcnet_forward.1} parent=1 // pred_check
      _
    $region19: #{rho_fcnet_forward.1} parent=1 // pred_check_branch
      %20 = sbr.rel (0) target = $region21
    $region20: #{rho_fcnet_forward.1} parent=1 // pred_region
      _
    $region21: #{rho_fcnet_forward.1} parent=1 // pred_fallthru
      _
    %v21 = vld [vmem:[%s1] sm:$0xff]
    %v22 = vld [vmem:[%s1 + $0x8] sm:$0xff]
    %v23 = vld [vmem:[%s1 + $0x10] sm:$0xff]
    %v24 = vld [vmem:[%s1 + $0x18] sm:$0xff]
    %v25 = vld [vmem:[%s2] sm:$0xff]
    %v26 = vld [vmem:[%s2 + $0x8] sm:$0xff]
    %v27 = vld [vmem:[%s2 + $0x10] sm:$0xff]
    %v28 = vld [vmem:[%s2 + $0x18] sm:$0xff]
    %v29 = vld [vmem:[%s0] sm:$0xff]
    %v30 = vld [vmem:[%s0 + $0x8] sm:$0xff]
    %v31 = vld [vmem:[%s0 + $0x10] sm:$0xff]
    %v32 = vld [vmem:[%s0 + $0x18] sm:$0xff]
    %v33 = vld [vmem:[%s0 + $0x20] sm:$0xff]
    %v34 = vld [vmem:[%s0 + $0x28] sm:$0xff]
    %v35 = vld [vmem:[%s0 + $0x30] sm:$0xff]
    %v36 = vld [vmem:[%s0 + $0x38] sm:$0xff]
    %v37 = vld [vmem:[%s0 + $0x40] sm:$0xff]
    %v38 = vld [vmem:[%s0 + $0x48] sm:$0xff]
    %v39 = vld [vmem:[%s0 + $0x50] sm:$0xff]
    %v40 = vld [vmem:[%s0 + $0x58] sm:$0xff]
    %v41 = vld [vmem:[%s0 + $0x60] sm:$0xff]
    %v42 = vld [vmem:[%s0 + $0x68] sm:$0xff]
    %v43 = vld [vmem:[%s0 + $0x70] sm:$0xff]
    %v44 = vld [vmem:[%s0 + $0x78] sm:$0xff]
    %46 = vset.pattern.permute.xlu0 0
    %47 = vperm.xlu0 %46, %v25
    %v48 = vpop.permute.xlu0 %47
    %51 = vset.pattern.permute.xlu0 0
    %52 = vperm.xlu0 %51, %v26
    %v53 = vpop.permute.xlu0 %52
    %56 = vset.pattern.permute.xlu0 0
    %57 = vperm.xlu0 %56, %v27
    %v58 = vpop.permute.xlu0 %57
    %61 = vset.pattern.permute.xlu0 0
    %62 = vperm.xlu0 %61, %v28
    %v63 = vpop.permute.xlu0 %62
    %vm65 = vcmask 130048
    %v67 = vsel %vm65, %v21, 0
    %v70 = vsel %vm65, %v22, 0
    %v73 = vsel %vm65, %v23, 0
    %v76 = vsel %vm65, %v24, 0
    %v79 = vsel %vm65, %v29, 0
    %v82 = vsel %vm65, %v30, 0
    %v85 = vsel %vm65, %v31, 0
    %v88 = vsel %vm65, %v32, 0
    %v91 = vsel %vm65, %v33, 0
    %v94 = vsel %vm65, %v34, 0
    %v97 = vsel %vm65, %v35, 0
    %v100 = vsel %vm65, %v36, 0
    %v103 = vsel %vm65, %v37, 0
    %v106 = vsel %vm65, %v38, 0
    %v109 = vsel %vm65, %v39, 0
    %v112 = vsel %vm65, %v40, 0
    %v115 = vsel %vm65, %v41, 0
    %v118 = vsel %vm65, %v42, 0
    %v121 = vsel %vm65, %v43, 0
    %v124 = vsel %vm65, %v44, 0
    %126 = vmatprep.subr.mxu0 0.0
    %127 = vmatpush1.xpose.msra.mxu0 %v79
    %128 = vmatprep.subr.mxu0 0.0
    %129 = vmatpush1.xpose.msra.mxu0 %v82
    %130 = vmatprep.subr.mxu0 0.0
    %131 = vmatpush1.xpose.msra.mxu0 %v85
    %132 = vmatprep.subr.mxu0 0.0
    %133 = vmatpush1.xpose.msra.mxu0 %v88
    %134 = vmatprep.subr.mxu0 0.0
    %135 = vmatpush1.xpose.msra.mxu0 %v91
    %136 = vmatprep.subr.mxu0 0.0
    %137 = vmatpush1.xpose.msra.mxu0 %v94
    %138 = vmatprep.subr.mxu0 0.0
    %139 = vmatpush1.xpose.msra.mxu0 %v97
    %140 = vmatprep.subr.mxu0 0.0
    %141 = vmatpush1.xpose.msra.mxu0 %v100
    %142 = vmatprep.subr.mxu0 0.0
    %143 = vmatpush1.xpose.msra.mxu0 %v103
    %144 = vmatprep.subr.mxu0 0.0
    %145 = vmatpush1.xpose.msra.mxu0 %v106
    %146 = vmatprep.subr.mxu0 0.0
    %147 = vmatpush1.xpose.msra.mxu0 %v109
    %148 = vmatprep.subr.mxu0 0.0
    %149 = vmatpush1.xpose.msra.mxu0 %v112
    %150 = vmatprep.subr.mxu0 0.0
    %151 = vmatpush1.xpose.msra.mxu0 %v115
    %152 = vmatprep.subr.mxu0 0.0
    %153 = vmatpush1.xpose.msra.mxu0 %v118
    %154 = vmatprep.subr.mxu0 0.0
    %155 = vmatpush1.xpose.msra.mxu0 %v121
    %156 = vmatprep.subr.mxu0 0.0
    %157 = vmatpush1.xpose.msra.mxu0 %v124
    %158 = vmatprep.subr.mxu0 0.0
    %159 = vmatpush1.xpose.msra.mxu0 0.0
    %160 = vmatprep.subr.mxu0 0.0
    %161 = vmatpush1.xpose.msra.mxu0 0.0
    %162 = vmatprep.subr.mxu0 0.0
    %163 = vmatpush1.xpose.msra.mxu0 0.0
    %164 = vmatprep.subr.mxu0 0.0
    %165 = vmatpush1.xpose.msra.mxu0 0.0
    %166 = vmatprep.subr.mxu0 0.0
    %167 = vmatpush1.xpose.msra.mxu0 0.0
    %168 = vmatprep.subr.mxu0 0.0
    %169 = vmatpush1.xpose.msra.mxu0 0.0
    %170 = vmatprep.subr.mxu0 0.0
    %171 = vmatpush1.xpose.msra.mxu0 0.0
    %172 = vmatprep.subr.mxu0 0.0
    %173 = vmatpush1.xpose.msra.mxu0 0.0
    %174 = vmatprep.subr.mxu0 0.0
    %175 = vmatpush1.xpose.msra.mxu0 0.0
    %176 = vmatprep.subr.mxu0 0.0
    %177 = vmatpush1.xpose.msra.mxu0 0.0
    %178 = vmatprep.subr.mxu0 0.0
    %179 = vmatpush1.xpose.msra.mxu0 0.0
    %180 = vmatprep.subr.mxu0 0.0
    %181 = vmatpush1.xpose.msra.mxu0 0.0
    %182 = vmatprep.subr.mxu0 0.0
    %183 = vmatpush1.xpose.msra.mxu0 0.0
    %184 = vmatprep.subr.mxu0 0.0
    %185 = vmatpush1.xpose.msra.mxu0 0.0
    %186 = vmatprep.subr.mxu0 0.0
    %187 = vmatpush1.xpose.msra.mxu0 0.0
    %188 = vmatprep.subr.mxu0 0.0
    %189 = vmatpush1.xpose.msra.mxu0 0.0
    %190 = vmatprep.mubr.f32.mxu0 0.0
    %191 = vmatmul.mubr.f32.gmra.mrb[0].mxu0 %v67
    %v192 = vpop.f32.mrb[0].mxu0
    %v193 = vadd.f32 %v48, %v192
    %v194 = vpop.f32.mrb[0].mxu0
    %195 = vmatprep.mubr.f32.mxu0 0.0
    %196 = vmatmul.mubr.f32.gmra.mrb[0].mxu0 %v70
    %v197 = vpop.f32.mrb[0].mxu0
    %v198 = vadd.f32 %v53, %v197
    %v199 = vpop.f32.mrb[0].mxu0
    %200 = vmatprep.mubr.f32.mxu0 0.0
    %201 = vmatmul.mubr.f32.gmra.mrb[0].mxu0 %v73
    %v202 = vpop.f32.mrb[0].mxu0
    %v203 = vadd.f32 %v58, %v202
    %v204 = vpop.f32.mrb[0].mxu0
    %205 = vmatprep.mubr.f32.mxu0 0.0
    %206 = vmatmul.mubr.f32.gmra.mrb[0].mxu0 %v76
    %v207 = vpop.f32.mrb[0].mxu0
    %v208 = vadd.f32 %v63, %v207
    %v209 = vpop.f32.mrb[0].mxu0
    %210 = vdwg.mxu0
    %v211 = vtanh.pop %v193
    %v212 = vtanh.pop %v198
    %v213 = vtanh.pop %v203
    %v214 = vtanh.pop %v208
    %v215 = vld [vmem:[%s3] sm:$0xff]
    %v216 = vld [vmem:[%s4] sm:$0xff]
    %218 = vset.pattern.permute.xlu0 0
    %219 = vperm.xlu0 %218, %v216
    %v220 = vpop.permute.xlu0 %219
    %vm222 = vcmask 261120
    %v224 = vsel %vm222, %v215, 0
    %226 = vmatprep.subr.mxu0 0.0
    %227 = vmatpush1.msra.mxu0 %v211
    %228 = vmatprep.subr.mxu0 0.0
    %229 = vmatpush1.msra.mxu0 %v212
    %230 = vmatprep.subr.mxu0 0.0
    %231 = vmatpush1.msra.mxu0 %v213
    %232 = vmatprep.subr.mxu0 0.0
    %233 = vmatpush1.msra.mxu0 %v214
    %234 = vmatprep.subr.mxu0 0.0
    %235 = vmatpush1.msra.mxu0 0.0
    %236 = vmatprep.subr.mxu0 0.0
    %237 = vmatpush1.msra.mxu0 0.0
    %238 = vmatprep.subr.mxu0 0.0
    %239 = vmatpush1.msra.mxu0 0.0
    %240 = vmatprep.subr.mxu0 0.0
    %241 = vmatpush1.msra.mxu0 0.0
    %242 = vmatprep.subr.mxu0 0.0
    %243 = vmatpush1.msra.mxu0 0.0
    %244 = vmatprep.subr.mxu0 0.0
    %245 = vmatpush1.msra.mxu0 0.0
    %246 = vmatprep.subr.mxu0 0.0
    %247 = vmatpush1.msra.mxu0 0.0
    %248 = vmatprep.subr.mxu0 0.0
    %249 = vmatpush1.msra.mxu0 0.0
    %250 = vmatprep.subr.mxu0 0.0
    %251 = vmatpush1.msra.mxu0 0.0
    %252 = vmatprep.subr.mxu0 0.0
    %253 = vmatpush1.msra.mxu0 0.0
    %254 = vmatprep.subr.mxu0 0.0
    %255 = vmatpush1.msra.mxu0 0.0
    %256 = vmatprep.subr.mxu0 0.0
    %257 = vmatpush1.msra.mxu0 0.0
    %258 = vmatprep.subr.mxu0 0.0
    %259 = vmatpush1.msra.mxu0 0.0
    %260 = vmatprep.subr.mxu0 0.0
    %261 = vmatpush1.msra.mxu0 0.0
    %262 = vmatprep.subr.mxu0 0.0
    %263 = vmatpush1.msra.mxu0 0.0
    %264 = vmatprep.subr.mxu0 0.0
    %265 = vmatpush1.msra.mxu0 0.0
    %266 = vmatprep.subr.mxu0 0.0
    %267 = vmatpush1.msra.mxu0 0.0
    %268 = vmatprep.subr.mxu0 0.0
    %269 = vmatpush1.msra.mxu0 0.0
    %270 = vmatprep.subr.mxu0 0.0
    %271 = vmatpush1.msra.mxu0 0.0
    %272 = vmatprep.subr.mxu0 0.0
    %273 = vmatpush1.msra.mxu0 0.0
    %274 = vmatprep.subr.mxu0 0.0
    %275 = vmatpush1.msra.mxu0 0.0
    %276 = vmatprep.subr.mxu0 0.0
    %277 = vmatpush1.msra.mxu0 0.0
    %278 = vmatprep.subr.mxu0 0.0
    %279 = vmatpush1.msra.mxu0 0.0
    %280 = vmatprep.subr.mxu0 0.0
    %281 = vmatpush1.msra.mxu0 0.0
    %282 = vmatprep.subr.mxu0 0.0
    %283 = vmatpush1.msra.mxu0 0.0
    %284 = vmatprep.subr.mxu0 0.0
    %285 = vmatpush1.msra.mxu0 0.0
    %286 = vmatprep.subr.mxu0 0.0
    %287 = vmatpush1.msra.mxu0 0.0
    %288 = vmatprep.subr.mxu0 0.0
    %289 = vmatpush1.msra.mxu0 0.0
    %290 = vmatprep.mubr.f32.mxu0 0.0
    %291 = vmatmul.mubr.f32.gmra.mrb[0].mxu0 %v224
    %v292 = vpop.f32.mrb[0].mxu0
    %v293 = vadd.f32 %v220, %v292
    %v294 = vpop.f32.mrb[0].mxu0
    %295 = vdwg.mxu0
    %v296 = vmul.f32 %v293, 1.442695
    %v297 = vpow.pop %v296
    %298 = vst [vmem:[#allocation2] sm:$0xff] %v297
    // Predicated region
    $region22: #{rho_fcnet_forward.1} parent=1 // pred_check
      _
    $region23: #{rho_fcnet_forward.1} parent=1 // pred_check_branch
      %300 = sbr.rel (0) target = $region25
    $region24: #{rho_fcnet_forward.1} parent=1 // pred_region
      %s302 = ssub.s32 128, 128
      %303 = vsyncadd [#allocation3], %s302
      %s305 = sshll.u32 [#allocation2], 4
      %s306 = int_to_ptr.vmem [resolvable:$true] %s305
      %308 = dma.vmem_to_hbm [thread:$0]  %s306, 128, %s5, [#allocation3]
    $region25: #{rho_fcnet_forward.1} parent=1 // pred_fallthru
      _
    // Predicated region
    $region26: #{rho_fcnet_forward.1} parent=1 // pred_check
      _
    $region27: #{rho_fcnet_forward.1} parent=1 // pred_check_branch
      %310 = sbr.rel (0) target = $region29
    $region28: #{rho_fcnet_forward.1} parent=1 // pred_region
      %311 = dma.done [#allocation3], 128
    $region29: #{rho_fcnet_forward.1} parent=1 // pred_fallthru
      _
    %312 = vsyncpa [#allocation3], 1

</llo_original>
